<compile_context>
chip_gen: v6e
topology: v6e:2x2x1
jax: 0.10.0
libtpu: 0.0.40
codegen_flags: <defaults>
</compile_context>

<pallas_src>
import functools

import jax
import jax.numpy as jnp
from jax import lax
from jax.experimental import pallas as pl
from jax.experimental.pallas import tpu as pltpu

LANES = 128
SUBLANES = 8


def _pow_gamma(base, gamma):
    """(base)**gamma; integer gamma (the common gamma=2) avoids exp/log on EUP."""
    g_int = int(round(gamma))
    if abs(gamma - g_int) < 1e-12 and 0 <= g_int <= 16:
        if g_int == 0:
            return jnp.ones_like(base)
        w = base
        for _ in range(g_int - 1):
            w = w * base
        return w
    return base ** jnp.float32(gamma)


def _focal_partial_kernel(x_ref, t_ref, o_ref, *, gamma, rows, tile_rows,
                          sub_rows, n_inner, need_row_mask, need_tile_skip,
                          binary_targets):
    o = pl.program_id(0)
    i = pl.program_id(1)

    @pl.when(i == 0)
    def _():
        o_ref[...] = jnp.zeros_like(o_ref)

    tile_idx = o * n_inner + i                 # logical (unclamped) tile index
    rows_left = rows - tile_idx * tile_rows    # valid rows from this tile's start

    n_sub = tile_rows // sub_rows
    iota_sub = lax.broadcasted_iota(jnp.int32, (sub_rows, LANES), 0)

    def compute():
        def body(s, acc):
            r0 = pl.multiple_of(s * sub_rows, sub_rows)
            xs = x_ref[pl.ds(r0, sub_rows), :].astype(jnp.float32)
            ts = t_ref[pl.ds(r0, sub_rows), :].astype(jnp.float32)

            one_m_x = 1.0 - xs
            t_is_one = ts == 1.0
            one_m_pt = jnp.where(t_is_one, one_m_x, xs)   # 1 - pt

            if binary_targets:
                # t in {0,1}: bce = -max(log(pt), -100) -> one log per element.
                pt = jnp.where(t_is_one, xs, one_m_x)
                neg_bce = jnp.maximum(jnp.log(pt), -100.0)
            else:
                # General (soft-target) path, algebraically identical to
                # t*log_x + (1-t)*log_1mx but one fewer mul/sub.
                log_x = jnp.maximum(jnp.log(xs), -100.0)
                log_1mx = jnp.maximum(jnp.log(one_m_x), -100.0)
                neg_bce = log_1mx + ts * (log_x - log_1mx)

            # Accumulate the NEGATIVE loss; the single negation (and alpha)
            # happen once on the final scalar in the wrapper.
            neg_loss = _pow_gamma(one_m_pt, gamma) * neg_bce

            if need_row_mask:
                # Single compare + select against a scalar row budget.  A vsel
                # cannot leak NaN/Inf from the unselected (OOB-garbage) operand,
                # so masking the result here is safe.
                valid = iota_sub < (rows_left - s * sub_rows)
                neg_loss = jnp.where(valid, neg_loss, 0.0)

            partial = neg_loss.reshape(sub_rows // SUBLANES, SUBLANES,
                                       LANES).sum(axis=0)
            return acc + partial

        acc = lax.fori_loop(0, n_sub, body,
                            jnp.zeros((SUBLANES, LANES), jnp.float32))
        o_ref[...] += acc

    if need_tile_skip:
        # Only emitted when the ceil core-split creates a duplicated tile; the
        # duplicate contributes nothing and its compute is skipped entirely.
        pl.when(rows_left > 0)(compute)
    else:
        compute()


def focal_loss_sum(inputs, targets, alpha=1.0, gamma=2.0, *,
                   max_tile_rows=4096, binary_targets=False):
    """sum(alpha * (1-pt)^gamma * BCE(inputs, targets)) on TPU via Pallas."""
    assert inputs.shape == targets.shape
    x = inputs.reshape(-1)
    t = targets.reshape(-1)
    n = x.shape[0]

    # Lane alignment.  When n is a multiple of 128 (and >= 1024) this is a pure
    # metadata reshape -- no HBM copy.  Otherwise pad the <128-element tail with
    # (x=1, t=1), which contributes exactly zero loss.
    # TODO(synk): for n % 128 != 0 the concatenate still rewrites the tensor
    # once; avoiding that entirely would need a manual 1-D DMA path.
    n_padded = max(pl.cdiv(n, LANES) * LANES, SUBLANES * LANES)
    pad = n_padded - n
    if pad:
        x = jnp.concatenate([x, jnp.ones((pad,), x.dtype)])
        t = jnp.concatenate([t, jnp.ones((pad,), t.dtype)])

    rows = n_padded // LANES
    x2 = x.reshape(rows, LANES)
    t2 = t.reshape(rows, LANES)

    # Tile rows: as large as useful, multiple of 8.  4096 rows = 2 MiB/input per
    # block -> 8 MiB with double buffering (safe on v5e's 16 MiB default too).
    if rows <= max_tile_rows:
        tile_rows = pl.cdiv(rows, SUBLANES) * SUBLANES
    else:
        tile_rows = (int(max_tile_rows) // SUBLANES) * SUBLANES
    tile_rows = max(tile_rows, SUBLANES)

    # Sub-chunk rows for the in-kernel loop (bounds vreg live ranges).
    sub_rows = SUBLANES
    for cand in (512, 256, 128, 64, 32, 16, 8):
        if tile_rows % cand == 0:
            sub_rows = cand
            break

    n_tiles = pl.cdiv(rows, tile_rows)
    n_outer = 2 if n_tiles >= 2 else 1          # v7x: one slice per TensorCore
    n_inner = pl.cdiv(n_tiles, n_outer)
    need_tile_skip = (n_outer * n_inner) != n_tiles   # duplicated tile exists
    need_row_mask = (n_tiles * tile_rows) != rows     # grid overhangs the rows

    if need_tile_skip:
        def in_map(o, i):
            # Clamp so the duplicated "extra" iteration re-reads a valid block;
            # its contribution is skipped inside the kernel.
            return (jnp.minimum(o * n_inner + i, n_tiles - 1), 0)
    else:
        def in_map(o, i):
            return (o * n_inner + i, 0)

    kernel = functools.partial(
        _focal_partial_kernel,
        gamma=float(gamma), rows=rows, tile_rows=tile_rows, sub_rows=sub_rows,
        n_inner=n_inner, need_row_mask=need_row_mask,
        need_tile_skip=need_tile_skip, binary_targets=bool(binary_targets))

    partials = pl.pallas_call(
        kernel,
        out_shape=jax.ShapeDtypeStruct((n_outer, SUBLANES, LANES), jnp.float32),
        grid_spec=pltpu.PrefetchScalarGridSpec(
            num_scalar_prefetch=0,
            grid=(n_outer, n_inner),
            in_specs=[
                pl.BlockSpec((tile_rows, LANES), in_map),
                pl.BlockSpec((tile_rows, LANES), in_map),
            ],
            out_specs=pl.BlockSpec((None, SUBLANES, LANES),
                                   lambda o, i: (o, 0, 0)),
        ),
        compiler_params=pltpu.CompilerParams(
            dimension_semantics=("parallel", "arbitrary"),
            vmem_limit_bytes=32 * 1024 * 1024,
        ),
    )(x2, t2)

    # Kernel accumulated -(1-pt)^gamma * bce; apply the single negation + alpha
    # to the tiny partial buffer, then the one cross-lane reduction.
    return jnp.float32(-alpha) * jnp.sum(partials)


def focal_loss_sum_ref(inputs, targets, alpha=1.0, gamma=2.0):
    """Pure-JAX reference mirroring the PyTorch module."""
    x = inputs.astype(jnp.float32)
    t = targets.astype(jnp.float32)
    log_x = jnp.maximum(jnp.log(x), -100.0)
    log_1mx = jnp.maximum(jnp.log(1.0 - x), -100.0)
    bce = -(t * log_x + (1.0 - t) * log_1mx)
    pt = jnp.where(t == 1.0, x, 1.0 - x)
    return jnp.sum(alpha * (1.0 - pt) ** gamma * bce)


if __name__ == "__main__":
    key = jax.random.PRNGKey(0)
    k1, k2 = jax.random.split(key)

    # NCHW inputs: probabilities in (0,1) and binary {0,1} targets.
    shape = (2, 4, 16, 16)
    inputs = jax.nn.sigmoid(jax.random.normal(k1, shape, dtype=jnp.float32))
    targets = (jax.random.uniform(k2, shape) > 0.5).astype(jnp.float32)

    ref = focal_loss_sum_ref(inputs, targets, alpha=1.0, gamma=2.0)

    # Default (soft-target-exact) path.
    out = focal_loss_sum(inputs, targets, alpha=1.0, gamma=2.0)
    out = jax.block_until_ready(out)
    assert jnp.allclose(out, ref, rtol=1e-4, atol=1e-3), (out, ref)

    # Opt-in binary-target fast path (single log per element).
    out_bin = focal_loss_sum(inputs, targets, alpha=1.0, gamma=2.0,
                             binary_targets=True)
    out_bin = jax.block_until_ready(out_bin)
    assert jnp.allclose(out_bin, ref, rtol=1e-4, atol=1e-3), (out_bin, ref)

    print("KERNEL_OK")
</pallas_src>

<mosaic_0001>
module attributes {stable_mosaic.version = 11 : i64} {
  func.func @_focal_partial_kernel(%arg0: i32, %arg1: i32, %arg2: memref<16x128xf32, #tpu.memory_space<vmem>>, %arg3: memref<16x128xf32, #tpu.memory_space<vmem>>, %arg4: memref<1x8x128xf32, #tpu.memory_space<vmem>>) attributes {dimension_semantics = [#tpu.dimension_semantics<parallel>, #tpu.dimension_semantics<arbitrary>], iteration_bounds = array<i64: 1, 1>, scalar_prefetch = 0 : i64, scratch_operands = 0 : i64, tpu.core_type = #tpu.core_type<tc>, window_params = [{transform_indices = @transform_0, window_bounds = array<i64: 16, 128>}, {transform_indices = @transform_1, window_bounds = array<i64: 16, 128>}, {transform_indices = @transform_2, window_bounds = array<i64: 1, 8, 128>}]} {
    %c0_i32 = arith.constant 0 : i32
    %0 = arith.cmpi eq, %arg1, %c0_i32 : i32
    %1 = arith.extui %0 : i1 to i32
    %c0_i32_0 = arith.constant 0 : i32
    %2 = arith.cmpi ne, %1, %c0_i32_0 : i32
    scf.if %2 {
      %cst_14 = arith.constant 0.000000e+00 : f32
      %35 = vector.broadcast %cst_14 : f32 to vector<8x128xf32>
      %c0_15 = arith.constant 0 : index
      %c0_16 = arith.constant 0 : index
      %c0_17 = arith.constant 0 : index
      %36 = vector.load %arg4[%c0_15, %c0_16, %c0_17] : memref<1x8x128xf32, #tpu.memory_space<vmem>>, vector<1x8x128xf32>
      %37 = vector.shape_cast %36 : vector<1x8x128xf32> to vector<8x128xf32>
      %38 = vector.shape_cast %35 : vector<8x128xf32> to vector<1x8x128xf32>
      tpu.vector_store %arg4[%c0_15, %c0_16, %c0_17], %38 {strides = array<i32>} : memref<1x8x128xf32, #tpu.memory_space<vmem>>, vector<1x8x128xf32>,
    } else {
    }
    %cst = arith.constant 0.000000e+00 : f32
    %3 = vector.broadcast %cst : f32 to vector<8x128xf32>
    %c0_i32_1 = arith.constant 0 : i32
    %c16_i32 = arith.constant 16 : i32
    %4 = arith.muli %c0_i32_1, %c16_i32 : i32
    %5 = tpu.assume_multiple %4, 16 : i32
    %6 = arith.index_cast %5 : i32 to index
    %c0 = arith.constant 0 : index
    %7 = vector.load %arg2[%6, %c0] : memref<16x128xf32, #tpu.memory_space<vmem>>, vector<16x128xf32>
    %8 = arith.index_cast %5 : i32 to index
    %c0_2 = arith.constant 0 : index
    %9 = vector.load %arg3[%8, %c0_2] : memref<16x128xf32, #tpu.memory_space<vmem>>, vector<16x128xf32>
    %cst_3 = arith.constant 1.000000e+00 : f32
    %10 = vector.broadcast %cst_3 : f32 to vector<16x128xf32>
    %11 = arith.subf %10, %7 : vector<16x128xf32>
    %cst_4 = arith.constant 1.000000e+00 : f32
    %12 = vector.broadcast %cst_4 : f32 to vector<16x128xf32>
    %13 = arith.cmpf oeq, %9, %12 : vector<16x128xf32>
    %14 = arith.select %13, %11, %7 : vector<16x128xi1>, vector<16x128xf32>
    %15 = math.log %7 : vector<16x128xf32>
    %cst_5 = arith.constant -1.000000e+02 : f32
    %16 = vector.broadcast %cst_5 : f32 to vector<16x128xf32>
    %17 = arith.maximumf %15, %16 : vector<16x128xf32>
    %18 = math.log %11 : vector<16x128xf32>
    %cst_6 = arith.constant -1.000000e+02 : f32
    %19 = vector.broadcast %cst_6 : f32 to vector<16x128xf32>
    %20 = arith.maximumf %18, %19 : vector<16x128xf32>
    %21 = arith.subf %17, %20 : vector<16x128xf32>
    %22 = arith.mulf %9, %21 : vector<16x128xf32>
    %23 = arith.addf %20, %22 : vector<16x128xf32>
    %24 = arith.mulf %14, %14 : vector<16x128xf32>
    %25 = arith.mulf %24, %23 : vector<16x128xf32>
    %26 = vector.shape_cast %25 : vector<16x128xf32> to vector<2x8x128xf32>
    %cst_7 = arith.constant dense<0.000000e+00> : vector<8x128xf32>
    %27 = vector.multi_reduction <add>, %26, %cst_7 [0] : vector<2x8x128xf32> to vector<8x128xf32>
    %28 = arith.addf %3, %27 : vector<8x128xf32>
    %c1_i32 = arith.constant 1 : i32
    %c0_8 = arith.constant 0 : index
    %c0_9 = arith.constant 0 : index
    %c0_10 = arith.constant 0 : index
    %29 = vector.load %arg4[%c0_8, %c0_9, %c0_10] : memref<1x8x128xf32, #tpu.memory_space<vmem>>, vector<1x8x128xf32>
    %30 = vector.shape_cast %29 : vector<1x8x128xf32> to vector<8x128xf32>
    %31 = arith.addf %30, %28 : vector<8x128xf32>
    %c0_11 = arith.constant 0 : index
    %c0_12 = arith.constant 0 : index
    %c0_13 = arith.constant 0 : index
    %32 = vector.load %arg4[%c0_11, %c0_12, %c0_13] : memref<1x8x128xf32, #tpu.memory_space<vmem>>, vector<1x8x128xf32>
    %33 = vector.shape_cast %32 : vector<1x8x128xf32> to vector<8x128xf32>
    %34 = vector.shape_cast %31 : vector<8x128xf32> to vector<1x8x128xf32>
    tpu.vector_store %arg4[%c0_11, %c0_12, %c0_13], %34 {strides = array<i32>} : memref<1x8x128xf32, #tpu.memory_space<vmem>>, vector<1x8x128xf32>,
    return
  }
  func.func @transform_0(%arg0: i32, %arg1: i32) -> (i32, i32) {
    %c1_i32 = arith.constant 1 : i32
    %0 = arith.muli %arg0, %c1_i32 : i32
    %1 = arith.addi %0, %arg1 : i32
    %c0_i32 = arith.constant 0 : i32
    %c0_i32_0 = arith.constant 0 : i32
    return %1, %c0_i32 : i32, i32
  }
  func.func @transform_1(%arg0: i32, %arg1: i32) -> (i32, i32) {
    %c1_i32 = arith.constant 1 : i32
    %0 = arith.muli %arg0, %c1_i32 : i32
    %1 = arith.addi %0, %arg1 : i32
    %c0_i32 = arith.constant 0 : i32
    %c0_i32_0 = arith.constant 0 : i32
    return %1, %c0_i32 : i32, i32
  }
  func.func @transform_2(%arg0: i32, %arg1: i32) -> (i32, i32, i32) {
    %c0_i32 = arith.constant 0 : i32
    %c0_i32_0 = arith.constant 0 : i32
    %c0_i32_1 = arith.constant 0 : i32
    return %arg0, %c0_i32, %c0_i32_0 : i32, i32, i32
  }
}

</mosaic_0001>

<llo_original>
// kernel: tpu_custom_call.1
$region0: #{tpu_custom_call.1}
  #allocation0 [shape = 'u32[]', space=smem, size = 0x4, offset = 0x4, fixed_abs, tag = 'smem constant byte address 0x4 - core index']
  #allocation1 [shape = 'u32[144,128]{1,0:T(1,128)}', space=vmem, size = 0x12000, scoped, tag = 'internal scratch']
  %s0 = inlined_call_operand.hbm [shape: f32[16,128], index: 0, kind: input, shape index: {}]
  %s1 = inlined_call_operand.hbm [shape: f32[16,128], index: 1, kind: input, shape index: {}]
  %s2 = inlined_call_operand.hbm [shape: f32[1,8,128], index: 2, kind: output, shape index: {}]
  %s3 = sld [smem:[#allocation0]]
  $region30: #{tpu_custom_call.1} parent=0
    _
  %s5 = ssub.s32 1, %s3
  %s6 = scalar_select 0, %s5, %s3
  $region1: #{tpu_custom_call.1} parent=0
    #allocation2 [shape = 'u8[8192]{0}', space=vmem, size = 0x2000, scoped, tag = 'input window, operand 0, single buffered']
    #allocation3 [shape = 's32[1]{0}', space=sflag, size = 0x4, scoped, tag = 'scoped memory for tpu_custom_call.1']
    #allocation4 [shape = 's32[1]{0}', space=sflag, size = 0x4, scoped, tag = 'scoped memory for tpu_custom_call.1']
    #allocation5 [shape = 'u8[8192]{0}', space=vmem, size = 0x2000, scoped, tag = 'input window, operand 1, single buffered']
    #allocation6 [shape = 's32[1]{0}', space=sflag, size = 0x4, scoped, tag = 'scoped memory for tpu_custom_call.1']
    #allocation7 [shape = 'u8[4096]{0}', space=vmem, size = 0x1000, scoped, tag = 'output window, operand 0, single buffered']
    %7 = vsyncpa [#allocation3], 0
    %8 = vsyncpa [#allocation6], 0
    %9 = vsyncpa [#allocation4], 0
    // Predicated region
    $region2: #{tpu_custom_call.1} parent=1 // pred_check
      _
    $region3: #{tpu_custom_call.1} parent=1 // pred_check_branch
      %11 = sbr.rel (0) target = $region5
    $region4: #{tpu_custom_call.1} parent=1 // pred_region
      %s12 = sadd.s32 0, 0
      %s13 = smul.u32 2, %s12
      %s15 = ssub.s32 256, 256
      %16 = vsyncadd [#allocation3], %s15
      %s17 = smul.addr %s13, 128
      %s18 = scalar_lea.hbm %s0, %s17
      %s19 = sshll.u32 [#allocation2], 4
      %s20 = int_to_ptr.vmem [resolvable:$true] %s19
      %25 = dma.hbm_to_vmem [thread:$0]  %s18, 256, %s20, [#allocation3], 128, 128, 8
    $region5: #{tpu_custom_call.1} parent=1 // pred_fallthru
      _
    // Predicated region
    $region6: #{tpu_custom_call.1} parent=1 // pred_check
      _
    $region7: #{tpu_custom_call.1} parent=1 // pred_check_branch
      %27 = sbr.rel (0) target = $region9
    $region8: #{tpu_custom_call.1} parent=1 // pred_region
      %s28 = sadd.s32 0, 0
      %s29 = smul.u32 2, %s28
      %s31 = ssub.s32 256, 256
      %32 = vsyncadd [#allocation6], %s31
      %s33 = smul.addr %s29, 128
      %s34 = scalar_lea.hbm %s1, %s33
      %s35 = sshll.u32 [#allocation5], 4
      %s36 = int_to_ptr.vmem [resolvable:$true] %s35
      %41 = dma.hbm_to_vmem [thread:$0]  %s34, 256, %s36, [#allocation6], 128, 128, 8
    $region9: #{tpu_custom_call.1} parent=1 // pred_fallthru
      _
    // Predicated region
    $region10: #{tpu_custom_call.1} parent=1 // pred_check
      _
    $region11: #{tpu_custom_call.1} parent=1 // pred_check_branch
      %43 = sbr.rel (0) target = $region13
    $region12: #{tpu_custom_call.1} parent=1 // pred_region
      %44 = dma.done [#allocation3], 256
    $region13: #{tpu_custom_call.1} parent=1 // pred_fallthru
      _
    // Predicated region
    $region14: #{tpu_custom_call.1} parent=1 // pred_check
      _
    $region15: #{tpu_custom_call.1} parent=1 // pred_check_branch
      %46 = sbr.rel (0) target = $region17
    $region16: #{tpu_custom_call.1} parent=1 // pred_region
      %47 = dma.done [#allocation6], 256
    $region17: #{tpu_custom_call.1} parent=1 // pred_fallthru
      _
    %s48 = sadd.s32 0, 0
    %s49 = smul.u32 2, %s48
    %s50 = sadd.s32 0, 0
    %s51 = smul.u32 2, %s50
    %p52 = scmp.eq.s32.totalorder 0, 0
    // Predicated region
    $region18: #{tpu_custom_call.1} parent=1 // pred_check
      %p53 = pneg %p52
    $region19: #{tpu_custom_call.1} parent=1 // pred_check_branch
      %55 = sbr.rel (%p53) target = $region21
    $region20: #{tpu_custom_call.1} parent=1 // pred_region
      %56 = vst [vmem:[#allocation7] sm:$0xff] 0.0
    $region21: #{tpu_custom_call.1} parent=1 // pred_fallthru
      _
    %v57 = vld [vmem:[#allocation2] sm:$0xff]
    %v58 = vld [vmem:[#allocation2 + $0x8] sm:$0xff]
    %v59 = vld [vmem:[#allocation5] sm:$0xff]
    %v60 = vld [vmem:[#allocation5 + $0x8] sm:$0xff]
    %v61 = vsub.f32 1.0, %v57
    %v62 = vsub.f32 1.0, %v58
    %vm63 = vcmp.eq.f32.partialorder %v59, 1.0
    %vm64 = vcmp.eq.f32.partialorder %v60, 1.0
    %v65 = vsel %vm63, %v61, %v57
    %v66 = vsel %vm64, %v62, %v58
    %v67 = vlog2.pop %v57
    %v68 = vmul.f32 %v67, 0.6931472
    %v69 = vlog2.pop %v58
    %v70 = vmul.f32 %v69, 0.6931472
    %v71 = vmax.f32 %v68, -100.0
    %v72 = vmax.f32 %v70, -100.0
    %v73 = vlog2.pop %v61
    %v74 = vmul.f32 %v73, 0.6931472
    %v75 = vlog2.pop %v62
    %v76 = vmul.f32 %v75, 0.6931472
    %v77 = vmax.f32 %v74, -100.0
    %v78 = vmax.f32 %v76, -100.0
    %v79 = vsub.f32 %v71, %v77
    %v80 = vsub.f32 %v72, %v78
    %v81 = vmul.f32 %v59, %v79
    %v82 = vmul.f32 %v60, %v80
    %v83 = vadd.f32 %v77, %v81
    %v84 = vadd.f32 %v78, %v82
    %v85 = vmul.f32 %v65, %v65
    %v86 = vmul.f32 %v66, %v66
    %v87 = vmul.f32 %v85, %v83
    %v88 = vmul.f32 %v86, %v84
    %v89 = vadd.f32 %v87, %v88
    %v90 = vadd.f32 %v89, 0.0
    %v91 = vld [vmem:[#allocation7] sm:$0xff]
    %v92 = vadd.f32 %v91, %v90
    %93 = vst [vmem:[#allocation7] sm:$0xff] %v92
    // Predicated region
    $region22: #{tpu_custom_call.1} parent=1 // pred_check
      _
    $region23: #{tpu_custom_call.1} parent=1 // pred_check_branch
      %95 = sbr.rel (0) target = $region25
    $region24: #{tpu_custom_call.1} parent=1 // pred_region
      %s97 = ssub.s32 128, 128
      %98 = vsyncadd [#allocation4], %s97
      %s100 = sshll.u32 [#allocation7], 4
      %s101 = int_to_ptr.vmem [resolvable:$true] %s100
      %103 = dma.vmem_to_hbm [thread:$0]  %s101, 128, %s2, [#allocation4]
    $region25: #{tpu_custom_call.1} parent=1 // pred_fallthru
      _
    // Predicated region
    $region26: #{tpu_custom_call.1} parent=1 // pred_check
      _
    $region27: #{tpu_custom_call.1} parent=1 // pred_check_branch
      %105 = sbr.rel (0) target = $region29
    $region28: #{tpu_custom_call.1} parent=1 // pred_region
      %106 = dma.done [#allocation4], 128
    $region29: #{tpu_custom_call.1} parent=1 // pred_fallthru
      _
    %107 = vsyncpa [#allocation3], 1
    %108 = vsyncpa [#allocation6], 1
    %109 = vsyncpa [#allocation4], 1

</llo_original>
